<compile_context>
chip_gen: v7x
topology: tpu7x:2x2x1
jax: 0.10.0
libtpu: 0.0.40
codegen_flags: <defaults>
</compile_context>

<pallas_src>
import functools

import jax
import jax.numpy as jnp
from jax.experimental import pallas as pl
from jax.experimental.pallas import tpu as pltpu


def _make_extreme_kernel(n_top: int, n_bottom: int, n_tiles: int,
                         has_mask: bool, with_indices: bool):
    """Kernel over a (N_TILES, TD) block: iterative select-max / select-min
    along the sublane (tile) axis.  K = n_top + n_bottom is small."""

    def body(x_ref, mask_ref, vals_ref, idx_ref):
        x = x_ref[...]                                   # (N, TD)
        if not jnp.issubdtype(x.dtype, jnp.floating):
            x = x.astype(jnp.float32)
        neg_inf = jnp.array(-jnp.inf, x.dtype)
        pos_inf = jnp.array(jnp.inf, x.dtype)
        big_idx = jnp.int32(n_tiles)
        iota = jax.lax.broadcasted_iota(jnp.int32, x.shape, 0)   # tile index

        if has_mask:
            msk = mask_ref[...] != 0                     # (N, TD) or (N, 1)

        if n_top > 0:
            xt = jnp.where(msk, neg_inf, x) if has_mask else x
            for k in range(n_top):
                mx = jnp.max(xt, axis=0, keepdims=True)           # (1, TD)
                cand = jnp.where(xt == mx, iota, big_idx)
                ix = jnp.min(cand, axis=0, keepdims=True)         # argmax (min idx on ties)
                val = mx
                if has_mask:
                    # masked (-inf) top values are zeroed, like the torch code
                    val = jnp.where(mx == neg_inf, jnp.zeros_like(mx), mx)
                vals_ref[k:k + 1, :] = val.astype(vals_ref.dtype)
                if with_indices:
                    idx_ref[k:k + 1, :] = ix
                if k + 1 < n_top:
                    xt = jnp.where(iota == ix, neg_inf, xt)       # remove selected tile

        if n_bottom > 0:
            xb = jnp.where(msk, pos_inf, x) if has_mask else x
            for k in range(n_bottom):
                mn = jnp.min(xb, axis=0, keepdims=True)
                cand = jnp.where(xb == mn, iota, big_idx)
                ix = jnp.min(cand, axis=0, keepdims=True)
                val = mn
                if has_mask:
                    # masked (+inf) bottom values are zeroed, like the torch code
                    val = jnp.where(mn == pos_inf, jnp.zeros_like(mn), mn)
                row = n_top + k
                vals_ref[row:row + 1, :] = val.astype(vals_ref.dtype)
                if with_indices:
                    idx_ref[row:row + 1, :] = ix
                if k + 1 < n_bottom:
                    xb = jnp.where(iota == ix, pos_inf, xb)

    # Specialize the signature to exactly the refs that exist.
    if has_mask and with_indices:
        def kernel(x_ref, m_ref, v_ref, i_ref):
            body(x_ref, m_ref, v_ref, i_ref)
    elif has_mask:
        def kernel(x_ref, m_ref, v_ref):
            body(x_ref, m_ref, v_ref, None)
    elif with_indices:
        def kernel(x_ref, v_ref, i_ref):
            body(x_ref, None, v_ref, i_ref)
    else:
        def kernel(x_ref, v_ref):
            body(x_ref, None, v_ref, None)
    return kernel


def _choose_td(n_tiles: int, d: int, x_itemsize: int, has_mask: bool) -> int:
    """Lane-tile size for the D axis: biggest tile whose double-buffered
    inputs stay under ~8 MiB (fits every chip's default scoped-VMEM)."""
    budget = 8 * 1024 * 1024
    per_lane = 2 * n_tiles * x_itemsize + (2 * n_tiles if has_mask else 0)
    max_td = budget // max(per_lane, 1)
    if d <= max_td:
        return d                       # full D (also satisfies the 128 rule)
    td = (max_td // 128) * 128
    return max(td, 128)


@functools.partial(jax.jit, static_argnames=("n_top", "n_bottom", "return_indices"))
def extreme_layer(x, mask=None, *, n_top=None, n_bottom=None, return_indices=False):
    """JAX/Pallas equivalent of ExtremeLayer.forward with dim=1.

    x:    (B, N_TILES, D) float
    mask: optional bool, broadcastable to x (True = masked out)
    returns values (B, n_top + n_bottom, D) [, indices int32 same shape]
    """
    if not (n_top or n_bottom):
        raise ValueError("one of n_top or n_bottom must have a value > 0.")
    k_top = int(n_top or 0)
    k_bot = int(n_bottom or 0)
    K = k_top + k_bot

    B, N, D = x.shape
    has_mask = mask is not None

    TD = _choose_td(N, D, x.dtype.itemsize, has_mask)
    grid = (B, pl.cdiv(D, TD))

    in_specs = [pl.BlockSpec((None, N, TD), lambda b, d: (b, 0, d))]
    inputs = [x]

    if has_mask:
        m = mask
        if m.ndim < x.ndim:
            m = m.reshape(m.shape + (1,) * (x.ndim - m.ndim))
        if m.shape[-1] == 1 and D != 1:
            # mask broadcasts along D: ship it un-broadcast as (B, N, 1) int8
            mask_in = jnp.broadcast_to(m, (B, N, 1)).astype(jnp.int8)
            in_specs.append(pl.BlockSpec((None, N, 1), lambda b, d: (b, 0, 0)))
        else:
            mask_in = jnp.broadcast_to(m, x.shape).astype(jnp.int8)
            in_specs.append(pl.BlockSpec((None, N, TD), lambda b, d: (b, 0, d)))
        inputs.append(mask_in)

    kernel = _make_extreme_kernel(k_top, k_bot, N, has_mask, return_indices)

    out_shape = [jax.ShapeDtypeStruct((B, K, D), x.dtype)]
    out_specs = [pl.BlockSpec((None, K, TD), lambda b, d: (b, 0, d))]
    if return_indices:
        out_shape.append(jax.ShapeDtypeStruct((B, K, D), jnp.int32))
        out_specs.append(pl.BlockSpec((None, K, TD), lambda b, d: (b, 0, d)))

    results = pl.pallas_call(
        kernel,
        out_shape=tuple(out_shape),
        grid_spec=pltpu.PrefetchScalarGridSpec(
            num_scalar_prefetch=0,
            grid=grid,
            in_specs=in_specs,
            out_specs=tuple(out_specs),
        ),
        compiler_params=pltpu.CompilerParams(
            dimension_semantics=("parallel", "parallel"),
        ),
    )(*inputs)

    if return_indices:
        return results[0], results[1]
    return results[0]


def _reference(x, mask, n_top, n_bottom):
    """Pure-JAX reference (sorting along tile axis) for a sanity check."""
    outs = []
    if n_top:
        xt = jnp.where(mask, -jnp.inf, x) if mask is not None else x
        top = -jnp.sort(-xt, axis=1)[:, :n_top, :]
        if mask is not None:
            top = jnp.where(jnp.isinf(top) & (top < 0), 0.0, top)
        outs.append(top)
    if n_bottom:
        xb = jnp.where(mask, jnp.inf, x) if mask is not None else x
        bot = jnp.sort(xb, axis=1)[:, :n_bottom, :]
        if mask is not None:
            bot = jnp.where(jnp.isinf(bot) & (bot > 0), 0.0, bot)
        outs.append(bot)
    return jnp.concatenate(outs, axis=1)


if __name__ == "__main__":
    key = jax.random.PRNGKey(0)
    kx, km, kd = jax.random.split(key, 3)

    B, N_TILES, D = 2, 16, 8
    N_TOP, N_BOTTOM = 2, 2

    x = jax.random.normal(kx, (B, N_TILES, D), dtype=jnp.float32)
    mask = jax.random.bernoulli(km, 0.25, (B, N_TILES, D))

    # no-mask path (values only)
    vals = jax.block_until_ready(
        extreme_layer(x, None, n_top=N_TOP, n_bottom=N_BOTTOM))
    ref = _reference(x, None, N_TOP, N_BOTTOM)
    assert vals.shape == (B, N_TOP + N_BOTTOM, D)
    assert jnp.allclose(vals, ref, atol=1e-5), "no-mask mismatch"

    # masked path, with indices
    vals_m, idx_m = extreme_layer(
        x, mask, n_top=N_TOP, n_bottom=N_BOTTOM, return_indices=True)
    vals_m = jax.block_until_ready(vals_m)
    idx_m = jax.block_until_ready(idx_m)
    ref_m = _reference(x, mask, N_TOP, N_BOTTOM)
    assert vals_m.shape == (B, N_TOP + N_BOTTOM, D)
    assert idx_m.shape == (B, N_TOP + N_BOTTOM, D)
    assert jnp.allclose(vals_m, ref_m, atol=1e-5), "masked mismatch"

    # mask that broadcasts along the feature axis (shipped un-broadcast)
    mask_d = jax.random.bernoulli(kd, 0.25, (B, N_TILES, 1))
    vals_d = jax.block_until_ready(
        extreme_layer(x, mask_d, n_top=N_TOP, n_bottom=N_BOTTOM))
    ref_d = _reference(x, jnp.broadcast_to(mask_d, x.shape), N_TOP, N_BOTTOM)
    assert jnp.allclose(vals_d, ref_d, atol=1e-5), "broadcast-mask mismatch"

    print("KERNEL_OK")
</pallas_src>

<mosaic_0001>
module attributes {stable_mosaic.version = 11 : i64} {
  func.func @kernel(%arg0: i32, %arg1: i32, %arg2: memref<1x16x8xf32, #tpu.memory_space<vmem>>, %arg3: memref<1x4x8xf32, #tpu.memory_space<vmem>>) attributes {dimension_semantics = [#tpu.dimension_semantics<parallel>, #tpu.dimension_semantics<parallel>], iteration_bounds = array<i64: 2, 1>, scalar_prefetch = 0 : i64, scratch_operands = 0 : i64, tpu.core_type = #tpu.core_type<tc>, window_params = [{transform_indices = @transform_0, window_bounds = array<i64: 1, 16, 8>}, {transform_indices = @transform_1, window_bounds = array<i64: 1, 4, 8>}]} {
    %c0 = arith.constant 0 : index
    %c0_0 = arith.constant 0 : index
    %c0_1 = arith.constant 0 : index
    %0 = vector.load %arg2[%c0, %c0_0, %c0_1] : memref<1x16x8xf32, #tpu.memory_space<vmem>>, vector<1x16x8xf32>
    %1 = vector.shape_cast %0 : vector<1x16x8xf32> to vector<16x8xf32>
    %2 = tpu.iota {dimensions = array<i32: 0>} : vector<16x8xi32>
    %cst = arith.constant dense<0xFF800000> : vector<8xf32>
    %3 = vector.multi_reduction <maximumf>, %1, %cst [0] : vector<16x8xf32> to vector<8xf32>
    %4 = vector.shape_cast %3 : vector<8xf32> to vector<1x8xf32>
    %5 = vector.broadcast %4 : vector<1x8xf32> to vector<16x8xf32>
    %6 = arith.cmpf oeq, %1, %5 : vector<16x8xf32>
    %c16_i32 = arith.constant 16 : i32
    %7 = vector.broadcast %c16_i32 : i32 to vector<16x8xi32>
    %8 = arith.select %6, %2, %7 : vector<16x8xi1>, vector<16x8xi32>
    %cst_2 = arith.constant dense<2147483647> : vector<8xi32>
    %9 = vector.multi_reduction <minsi>, %8, %cst_2 [0] : vector<16x8xi32> to vector<8xi32>
    %10 = vector.shape_cast %9 : vector<8xi32> to vector<1x8xi32>
    %c0_3 = arith.constant 0 : index
    %c0_4 = arith.constant 0 : index
    %c0_5 = arith.constant 0 : index
    %11 = vector.load %arg3[%c0_3, %c0_4, %c0_5] : memref<1x4x8xf32, #tpu.memory_space<vmem>>, vector<1x1x8xf32>
    %12 = vector.shape_cast %11 : vector<1x1x8xf32> to vector<1x8xf32>
    %13 = vector.shape_cast %4 : vector<1x8xf32> to vector<1x1x8xf32>
    tpu.vector_store %arg3[%c0_3, %c0_4, %c0_5], %13 {strides = array<i32>} : memref<1x4x8xf32, #tpu.memory_space<vmem>>, vector<1x1x8xf32>,
    %14 = vector.broadcast %10 : vector<1x8xi32> to vector<16x8xi32>
    %15 = arith.cmpi eq, %2, %14 : vector<16x8xi32>
    %cst_6 = arith.constant 0xFF800000 : f32
    %16 = vector.broadcast %cst_6 : f32 to vector<16x8xf32>
    %17 = arith.select %15, %16, %1 : vector<16x8xi1>, vector<16x8xf32>
    %cst_7 = arith.constant dense<0xFF800000> : vector<8xf32>
    %18 = vector.multi_reduction <maximumf>, %17, %cst_7 [0] : vector<16x8xf32> to vector<8xf32>
    %19 = vector.shape_cast %18 : vector<8xf32> to vector<1x8xf32>
    %c0_8 = arith.constant 0 : index
    %c1 = arith.constant 1 : index
    %c0_9 = arith.constant 0 : index
    %20 = vector.load %arg3[%c0_8, %c1, %c0_9] : memref<1x4x8xf32, #tpu.memory_space<vmem>>, vector<1x1x8xf32>
    %21 = vector.shape_cast %20 : vector<1x1x8xf32> to vector<1x8xf32>
    %22 = vector.shape_cast %19 : vector<1x8xf32> to vector<1x1x8xf32>
    tpu.vector_store %arg3[%c0_8, %c1, %c0_9], %22 {strides = array<i32>} : memref<1x4x8xf32, #tpu.memory_space<vmem>>, vector<1x1x8xf32>,
    %cst_10 = arith.constant dense<0x7F800000> : vector<8xf32>
    %23 = vector.multi_reduction <minimumf>, %1, %cst_10 [0] : vector<16x8xf32> to vector<8xf32>
    %24 = vector.shape_cast %23 : vector<8xf32> to vector<1x8xf32>
    %25 = vector.broadcast %24 : vector<1x8xf32> to vector<16x8xf32>
    %26 = arith.cmpf oeq, %1, %25 : vector<16x8xf32>
    %c16_i32_11 = arith.constant 16 : i32
    %27 = vector.broadcast %c16_i32_11 : i32 to vector<16x8xi32>
    %28 = arith.select %26, %2, %27 : vector<16x8xi1>, vector<16x8xi32>
    %cst_12 = arith.constant dense<2147483647> : vector<8xi32>
    %29 = vector.multi_reduction <minsi>, %28, %cst_12 [0] : vector<16x8xi32> to vector<8xi32>
    %30 = vector.shape_cast %29 : vector<8xi32> to vector<1x8xi32>
    %c0_13 = arith.constant 0 : index
    %c2 = arith.constant 2 : index
    %c0_14 = arith.constant 0 : index
    %31 = vector.load %arg3[%c0_13, %c2, %c0_14] : memref<1x4x8xf32, #tpu.memory_space<vmem>>, vector<1x1x8xf32>
    %32 = vector.shape_cast %31 : vector<1x1x8xf32> to vector<1x8xf32>
    %33 = vector.shape_cast %24 : vector<1x8xf32> to vector<1x1x8xf32>
    tpu.vector_store %arg3[%c0_13, %c2, %c0_14], %33 {strides = array<i32>} : memref<1x4x8xf32, #tpu.memory_space<vmem>>, vector<1x1x8xf32>,
    %34 = vector.broadcast %30 : vector<1x8xi32> to vector<16x8xi32>
    %35 = arith.cmpi eq, %2, %34 : vector<16x8xi32>
    %cst_15 = arith.constant 0x7F800000 : f32
    %36 = vector.broadcast %cst_15 : f32 to vector<16x8xf32>
    %37 = arith.select %35, %36, %1 : vector<16x8xi1>, vector<16x8xf32>
    %cst_16 = arith.constant dense<0x7F800000> : vector<8xf32>
    %38 = vector.multi_reduction <minimumf>, %37, %cst_16 [0] : vector<16x8xf32> to vector<8xf32>
    %39 = vector.shape_cast %38 : vector<8xf32> to vector<1x8xf32>
    %c0_17 = arith.constant 0 : index
    %c3 = arith.constant 3 : index
    %c0_18 = arith.constant 0 : index
    %40 = vector.load %arg3[%c0_17, %c3, %c0_18] : memref<1x4x8xf32, #tpu.memory_space<vmem>>, vector<1x1x8xf32>
    %41 = vector.shape_cast %40 : vector<1x1x8xf32> to vector<1x8xf32>
    %42 = vector.shape_cast %39 : vector<1x8xf32> to vector<1x1x8xf32>
    tpu.vector_store %arg3[%c0_17, %c3, %c0_18], %42 {strides = array<i32>} : memref<1x4x8xf32, #tpu.memory_space<vmem>>, vector<1x1x8xf32>,
    return
  }
  func.func @transform_0(%arg0: i32, %arg1: i32) -> (i32, i32, i32) {
    %c0_i32 = arith.constant 0 : i32
    %c0_i32_0 = arith.constant 0 : i32
    return %arg0, %c0_i32, %arg1 : i32, i32, i32
  }
  func.func @transform_1(%arg0: i32, %arg1: i32) -> (i32, i32, i32) {
    %c0_i32 = arith.constant 0 : i32
    %c0_i32_0 = arith.constant 0 : i32
    return %arg0, %c0_i32, %arg1 : i32, i32, i32
  }
}

</mosaic_0001>

<llo_original>
// kernel: extreme_layer.1
$region0: #{extreme_layer.1}
  #allocation0 [shape = 'u32[]', space=smem, size = 0x4, offset = 0x4, fixed_abs, tag = 'smem constant byte address 0x4 - core index']
  #allocation1 [shape = 'u32[144,128]{1,0:T(1,128)}', space=vmem, size = 0x12000, scoped, tag = 'internal scratch']
  %s0 = inlined_call_operand.vmem [shape: f32[2,16,8], index: 0, kind: input, shape index: {}]
  %s1 = inlined_call_operand.hbm [shape: f32[2,4,8], index: 1, kind: output, shape index: {}]
  %s2 = sld [smem:[#allocation0]]
  $region37: #{extreme_layer.1} parent=0
    _
  %s4 = ssub.s32 1, %s2
  %s5 = scalar_select 0, %s4, %s2
  $region1: #{extreme_layer.1} parent=0
    #allocation2 [shape = 'u8[4096]{0}', space=vmem, size = 0x1000, scoped, tag = 'output window, operand 0']
    #allocation3 [shape = 's32[2]{0}', space=sflag, size = 0x8, scoped, tag = 'scoped memory for extreme_layer.1']
    %6 = vsyncpa [#allocation3], 0
    %s7 = scalar_lea.sflag [#allocation3], 1
    %8 = vsyncpa %s7, 0
    loop: start=0, step=1, limit=4
    $region2: #{extreme_layer.1} parent=1 // loop_pre_header
      _
    $region3: #{extreme_layer.1} parent=1 // loop_header
      %s10 = sphi 0, %s14
      %p11 = scmp.ge.s32.totalorder %s10, 4
      %s17 = sphi 0, %s29
      %s18 = sphi 0, %s25
      %s19 = sphi 0, %s17
      %s20 = sphi 0, %s18
      %s21 = sphi 0, %s19
      %s22 = sphi 0, %s20
      %s34 = sphi 0, %s36
      %s37 = sphi 0, %s34
      %s38 = sphi 0, %s37
      %s54 = sphi 0, %s38
      %s62 = sphi 0, %s64
      %s65 = sphi 0, %s62
      %s66 = sphi 0, %s65
      %s82 = sphi 0, %s66
    $region4: #{extreme_layer.1} parent=1 // loop_header_branch
      %13 = sbr.rel (%p11) target = $region8
    $region5: #{extreme_layer.1} parent=1 // loop_body
      %s15 = ssub.s32 %s10, 1
      %s16 = ssub.s32 %s10, 2
      %s23 = sadd.s32 1, %s18
      %p24 = scmp.ge.s32.totalorder %s23, 1
      %s25 = scalar_select %p24, 0, %s23
      %s26 = sadd.s32 1, %s17
      %s27 = scalar_select %p24, %s26, %s17
      %p28 = scmp.ge.s32.totalorder %s27, 2
      %s29 = scalar_select %p28, 0, %s27
      %s30 = ssub.s32 %s17, %s29
      %s31 = ssub.s32 %s18, %s25
      %s32 = sor.u32 %s30, %s31
      %p33 = scmp.eq.s32.totalorder %s32, 0
      %s35 = sadd.s32 %s34, 1
      %s36 = scalar_select %p33, %s34, %s35
      %p39 = pneg %p33
      %p40 = scmp.eq.s32.totalorder %s10, 1
      %p41 = por %p39, %p40
      %p42 = scmp.ne.s32.totalorder %s34, %s37
      %p43 = scmp.eq.s32.totalorder %s10, 0
      %p44 = por %p42, %p43
      %p45 = scmp.ne.s32.totalorder %s34, %s37
      %p46 = scmp.eq.s32.totalorder %s15, 1
      %p47 = por %p45, %p46
      %p48 = scmp.ne.s32.totalorder %s37, %s38
      %p49 = scmp.eq.s32.totalorder %s15, 0
      %p50 = por %p48, %p49
      %p51 = scmp.ne.s32.totalorder %s37, %s38
      %p52 = scmp.eq.s32.totalorder %s16, 1
      %p53 = por %p51, %p52
      %p55 = scmp.ne.s32.totalorder %s38, %s54
      %p56 = scmp.eq.s32.totalorder %s16, 0
      %p57 = por %p55, %p56
      %s58 = ssub.s32 %s17, %s29
      %s59 = ssub.s32 %s18, %s25
      %s60 = sor.u32 %s58, %s59
      %p61 = scmp.eq.s32.totalorder %s60, 0
      %s63 = sadd.s32 %s62, 1
      %s64 = scalar_select %p61, %s62, %s63
      %p67 = pneg %p61
      %p68 = scmp.eq.s32.totalorder %s10, 1
      %p69 = por %p67, %p68
      %p70 = scmp.ne.s32.totalorder %s62, %s65
      %p71 = scmp.eq.s32.totalorder %s10, 0
      %p72 = por %p70, %p71
      %p73 = scmp.ne.s32.totalorder %s62, %s65
      %p74 = scmp.eq.s32.totalorder %s15, 1
      %p75 = por %p73, %p74
      %p76 = scmp.ne.s32.totalorder %s65, %s66
      %p77 = scmp.eq.s32.totalorder %s15, 0
      %p78 = por %p76, %p77
      %p79 = scmp.ne.s32.totalorder %s65, %s66
      %p80 = scmp.eq.s32.totalorder %s16, 1
      %p81 = por %p79, %p80
      %p83 = scmp.ne.s32.totalorder %s66, %s82
      %p84 = scmp.eq.s32.totalorder %s16, 0
      %p85 = por %p83, %p84
      %p86 = scmp.le.s32.totalorder 1, %s10
      %p87 = scmp.lt.s32.totalorder %s10, 3
      %p88 = pnand %p86, %p87
      %p89 = pneg %p88
      // Predicated region
      $region9: #{extreme_layer.1} parent=5 // pred_check
        _
      $region10: #{extreme_layer.1} parent=5 // pred_check_branch
        %91 = sbr.rel (%p88) target = $region12
      $region11: #{extreme_layer.1} parent=5 // pred_region
        %s92 = ssub.s32 %s10, 1
      $region12: #{extreme_layer.1} parent=5 // pred_fallthru
        _
      %p93 = scmp.lt.s32.totalorder %s10, 2
      // Predicated region
      $region13: #{extreme_layer.1} parent=5 // pred_check
        %p94 = pneg %p93
      $region14: #{extreme_layer.1} parent=5 // pred_check_branch
        %96 = sbr.rel (%p94) target = $region16
      $region15: #{extreme_layer.1} parent=5 // pred_region
        // Predicated region
        $region17: #{extreme_layer.1} parent=15 // pred_check
          %p97 = pneg %p44
        $region18: #{extreme_layer.1} parent=15 // pred_check_branch
          %99 = sbr.rel (%p97) target = $region20
        $region19: #{extreme_layer.1} parent=15 // pred_region
          %p100 = scmp.lt.s32.totalorder %s17, 1
          %s101 = scalar_select %p100, %s17, 1
          %p102 = scmp.lt.s32.totalorder %s18, 0
          %s103 = scalar_select %p102, %s18, 0
          %s104 = smul.addr %s101, 2
          %s105 = sadd.s32 %s103, %s104
          %s106 = smul.addr %s105, 8
          %s107 = scalar_lea.vmem %s0, %s106
        $region20: #{extreme_layer.1} parent=15 // pred_fallthru
          _
      $region16: #{extreme_layer.1} parent=5 // pred_fallthru
        _
      %p108 = scmp.le.s32.totalorder 1, %s10
      %p109 = scmp.lt.s32.totalorder %s10, 3
      %p110 = pnand %p108, %p109
      %p111 = pneg %p110
      // Predicated region
      $region21: #{extreme_layer.1} parent=5 // pred_check
        _
      $region22: #{extreme_layer.1} parent=5 // pred_check_branch
        %113 = sbr.rel (%p110) target = $region24
      $region23: #{extreme_layer.1} parent=5 // pred_region
        %s114 = ssub.s32 %s10, 1
        %p115 = scmp.lt.s32.totalorder %s19, 1
        %s116 = scalar_select %p115, %s19, 1
        %p117 = scmp.lt.s32.totalorder %s20, 0
        %s118 = scalar_select %p117, %s20, 0
        %s119 = smul.addr %s116, 2
        %s120 = sadd.s32 %s118, %s119
        %s121 = smul.addr %s120, 8
        %s122 = scalar_lea.vmem %s0, %s121
        %p123 = pneg %p50
        %p124 = pneg %p47
        %p125 = pneg %p78
        %p126 = pneg %p75
        %s127 = sand.u32 %s65, 1
        %s128 = scalar_lea.sflag [#allocation3], %s127
        %s129 = sand.u32 %s65, 1
        %s130 = smul.addr %s129, 4
        %s131 = scalar_lea.vmem [#allocation2], %s130
        %p132 = scmp.lt.s32.totalorder %s19, 1
        %s133 = scalar_select %p132, %s19, 1
        %p134 = scmp.lt.s32.totalorder %s20, 0
        %s135 = scalar_select %p134, %s20, 0
        %s136 = smul.addr %s133, 2
        %s137 = sadd.s32 %s135, %s136
        %s138 = smul.addr %s137, 8
        %s139 = scalar_lea.vmem %s0, %s138
        %v140 = vld [vmem:[%s139] sm:$0xff]
        %v141 = vld [vmem:[%s139 + $0x8] sm:$0xff]
        %v142 = vlaneseq
        %v143 = vshrl.u32 %v142, 7
        %v144 = vadd.s32 %v143, 8
        %vm145 = vcmask 64512
        %v146 = vsel %vm145, %v140, -inf
        %v147 = vsel %vm145, %v141, -inf
        %v148 = vmax.f32 %v146, %v147
        %v149 = vrot.slane %v148, 4
        %v150 = vmax.f32 %v148, %v149
        %v151 = vrot.slane %v150, 2
        %v152 = vmax.f32 %v150, %v151
        %v153 = vrot.slane %v152, 1
        %v154 = vmax.f32 %v152, %v153
        %vm155 = vcmp.eq.f32.partialorder %v140, %v154
        %vm156 = vcmp.eq.f32.partialorder %v141, %v154
        %v157 = vsel %vm155, %v143, 16
        %v158 = vsel %vm156, %v144, 16
        %v159 = vsel %vm145, %v157, 2147483647
        %v160 = vsel %vm145, %v158, 2147483647
        %vm161 = vcmp.lt.s32.totalorder %v159, %v160
        %v162 = vsel %vm161, %v159, %v160
        %v163 = vrot.slane %v162, 4
        %vm164 = vcmp.lt.s32.totalorder %v162, %v163
        %v165 = vsel %vm164, %v162, %v163
        %v166 = vrot.slane %v165, 2
        %vm167 = vcmp.lt.s32.totalorder %v165, %v166
        %v168 = vsel %vm167, %v165, %v166
        %v169 = vrot.slane %v168, 1
        %vm170 = vcmp.lt.s32.totalorder %v168, %v169
        %v171 = vsel %vm170, %v168, %v169
        %vm172 = vcmask 57344
        %173 = vst.msk [vmem:[%s131] sm:$0x1] %vm172, %v154
        %vm174 = vcmp.eq.s32.totalorder %v143, %v171
        %vm175 = vcmp.eq.s32.totalorder %v144, %v171
        %v176 = vsel %vm174, -inf, %v140
        %v177 = vsel %vm175, -inf, %v141
        %v178 = vsel %vm145, %v176, -inf
        %v179 = vsel %vm145, %v177, -inf
        %v180 = vmax.f32 %v178, %v179
        %v181 = vrot.slane %v180, 4
        %v182 = vmax.f32 %v180, %v181
        %v183 = vrot.slane %v182, 2
        %v184 = vmax.f32 %v182, %v183
        %v185 = vrot.slane %v184, 1
        %v186 = vmax.f32 %v184, %v185
        %187 = vst.msk [vmem:[%s131 + $0x1] sm:$0x1] %vm172, %v186
        %v188 = vsel %vm145, %v140, inf
        %v189 = vsel %vm145, %v141, inf
        %v190 = vmin.f32 %v188, %v189
        %v191 = vrot.slane %v190, 4
        %v192 = vmin.f32 %v190, %v191
        %v193 = vrot.slane %v192, 2
        %v194 = vmin.f32 %v192, %v193
        %v195 = vrot.slane %v194, 1
        %v196 = vmin.f32 %v194, %v195
        %vm197 = vcmp.eq.f32.partialorder %v140, %v196
        %vm198 = vcmp.eq.f32.partialorder %v141, %v196
        %v199 = vsel %vm197, %v143, 16
        %v200 = vsel %vm198, %v144, 16
        %v201 = vsel %vm145, %v199, 2147483647
        %v202 = vsel %vm145, %v200, 2147483647
        %vm203 = vcmp.lt.s32.totalorder %v201, %v202
        %v204 = vsel %vm203, %v201, %v202
        %v205 = vrot.slane %v204, 4
        %vm206 = vcmp.lt.s32.totalorder %v204, %v205
        %v207 = vsel %vm206, %v204, %v205
        %v208 = vrot.slane %v207, 2
        %vm209 = vcmp.lt.s32.totalorder %v207, %v208
        %v210 = vsel %vm209, %v207, %v208
        %v211 = vrot.slane %v210, 1
        %vm212 = vcmp.lt.s32.totalorder %v210, %v211
        %v213 = vsel %vm212, %v210, %v211
        %214 = vst.msk [vmem:[%s131 + $0x2] sm:$0x1] %vm172, %v196
        %vm215 = vcmp.eq.s32.totalorder %v143, %v213
        %vm216 = vcmp.eq.s32.totalorder %v144, %v213
        %v217 = vsel %vm215, inf, %v140
        %v218 = vsel %vm216, inf, %v141
        %v219 = vsel %vm145, %v217, inf
        %v220 = vsel %vm145, %v218, inf
        %v221 = vmin.f32 %v219, %v220
        %v222 = vrot.slane %v221, 4
        %v223 = vmin.f32 %v221, %v222
        %v224 = vrot.slane %v223, 2
        %v225 = vmin.f32 %v223, %v224
        %v226 = vrot.slane %v225, 1
        %v227 = vmin.f32 %v225, %v226
        %228 = vst.msk [vmem:[%s131 + $0x3] sm:$0x1] %vm172, %v227
        %s229 = sand.u32 %s65, 1
        %s230 = scalar_lea.sflag [#allocation3], %s229
        %s231 = sand.u32 %s65, 1
        %s232 = smul.addr %s231, 4
        %s233 = scalar_lea.vmem [#allocation2], %s232
        // Predicated region
        $region25: #{extreme_layer.1} parent=23 // pred_check
          %p234 = pneg %p75
        $region26: #{extreme_layer.1} parent=23 // pred_check_branch
          %236 = sbr.rel (%p234) target = $region28
        $region27: #{extreme_layer.1} parent=23 // pred_region
          %s238 = ssub.s32 64, 64
          %239 = vsyncadd %s230, %s238
          %s240 = sadd.s32 %s20, %s19
          %s241 = smul.addr %s240, 64
          %s242 = scalar_lea.hbm %s1, %s241
          %s244 = sshll.u32 %s233, 4
          %s245 = int_to_ptr.vmem [resolvable:$true] %s244
          %247 = dma.vmem_to_hbm [thread:$0]  %s245, 64, %s242, %s230
        $region28: #{extreme_layer.1} parent=23 // pred_fallthru
          _
      $region24: #{extreme_layer.1} parent=5 // pred_fallthru
        _
      %p248 = scmp.le.s32.totalorder 2, %s10
      // Predicated region
      $region29: #{extreme_layer.1} parent=5 // pred_check
        %p249 = pneg %p248
      $region30: #{extreme_layer.1} parent=5 // pred_check_branch
        %251 = sbr.rel (%p249) target = $region32
      $region31: #{extreme_layer.1} parent=5 // pred_region
        %s252 = ssub.s32 %s10, 2
        // Predicated region
        $region33: #{extreme_layer.1} parent=31 // pred_check
          %p253 = pneg %p81
        $region34: #{extreme_layer.1} parent=31 // pred_check_branch
          %255 = sbr.rel (%p253) target = $region36
        $region35: #{extreme_layer.1} parent=31 // pred_region
          %s256 = sand.u32 %s66, 1
          %s257 = scalar_lea.sflag [#allocation3], %s256
          %s258 = sand.u32 %s66, 1
          %s259 = smul.addr %s258, 4
          %s260 = scalar_lea.vmem [#allocation2], %s259
          %261 = dma.done %s257, 64
        $region36: #{extreme_layer.1} parent=31 // pred_fallthru
          _
      $region32: #{extreme_layer.1} parent=5 // pred_fallthru
        _
    $region6: #{extreme_layer.1} parent=1 // loop_footer
      %s14 = sadd.s32 1, %s10
    $region7: #{extreme_layer.1} parent=1 // loop_footer_branch
      %9 = sbr.rel target = $region3
    $region8: #{extreme_layer.1} parent=1 // loop_exit
      _
    %262 = vsyncpa [#allocation3], 1
    %s263 = scalar_lea.sflag [#allocation3], 1
    %264 = vsyncpa %s263, 1

</llo_original>
